<compile_context>
chip_gen: v6e
topology: v6e:2x2x1
jax: 0.10.0
libtpu: 0.0.40
codegen_flags: <defaults>
</compile_context>

<pallas_src>
import functools

import jax
import jax.numpy as jnp
from jax.experimental import pallas as pl
from jax.experimental.pallas import tpu as pltpu


def _round_up(v, m):
    return (v + m - 1) // m * m


def lora_kernel(x_ref, wt_ref, bias_ref, at_ref, bt_ref, o_ref, z_sc):
    """One (tm, tn) output tile:  y = x @ Wt + bias + (x @ At) @ Bt."""
    j = pl.program_id(1)            # out_features tile index (inner grid axis)
    x = x_ref[...]                  # (tm, in_f)

    # z = x @ A^T only depends on the batch tile: compute it once per batch
    # tile (first N tile) and reuse the cached copy for every other N tile.
    @pl.when(j == 0)
    def _():
        z_sc[...] = jnp.dot(
            x, at_ref[...], preferred_element_type=jnp.float32
        ).astype(z_sc.dtype)

    # Base path: x @ W^T tile (MXU, f32 accumulate).
    acc = jnp.dot(x, wt_ref[...], preferred_element_type=jnp.float32)
    # LoRA path: z @ B^T tile (r padded to a lane-dense 128 multiple,
    # padded rows of B^T are zero so they contribute nothing).
    acc += jnp.dot(z_sc[...], bt_ref[...], preferred_element_type=jnp.float32)
    acc += bias_ref[...]            # (1, tn) broadcasts over tm rows
    o_ref[...] = acc.astype(o_ref.dtype)


@functools.partial(jax.jit, static_argnames=("tm_max", "tn_max"))
def lora_forward(x, W, b, A, B, *, tm_max=256, tn_max=512):
    """LoRA forward:  y = x @ W^T + b + (x @ A^T) @ B^T.

    x: [batch, in_f]   W: [out_f, in_f]   b: [out_f]
    A: [r, in_f]       B: [out_f, r]      (PyTorch nn.Linear layouts)
    """
    batch, in_f = x.shape
    out_f = W.shape[0]
    r = A.shape[0]
    param_dtype = W.dtype

    # ---- Static tile-size / padding choices --------------------------------
    # Batch tile: a single block if the (8-aligned) batch fits, else tm_max.
    b8 = _round_up(batch, 8)
    tm = b8 if b8 <= tm_max else tm_max
    batch_p = _round_up(batch, tm)
    # Output tile: lane-dense multiple of 128; pad out_features up to it.
    tn = min(tn_max, _round_up(out_f, 128))
    out_p = _round_up(out_f, tn)
    # Rank padded to a full lane tile so the z intermediate is lane-dense.
    r_p = _round_up(r, 128)

    # ---- Wrapper-side glue: transpose + zero-pad to aligned shapes ---------
    xp = jnp.pad(x, ((0, batch_p - batch), (0, 0)))               # (batch_p, in_f)
    Wt = jnp.pad(W.T, ((0, 0), (0, out_p - out_f)))               # (in_f, out_p)
    At = jnp.pad(A.T, ((0, 0), (0, r_p - r)))                     # (in_f, r_p)
    Bt = jnp.pad(B.T, ((0, r_p - r), (0, out_p - out_f)))         # (r_p, out_p)
    bias = jnp.pad(b, (0, out_p - out_f)).reshape(1, out_p)       # (1, out_p)

    grid = (batch_p // tm, out_p // tn)

    out = pl.pallas_call(
        lora_kernel,
        out_shape=jax.ShapeDtypeStruct((batch_p, out_p), x.dtype),
        grid=grid,
        in_specs=[
            pl.BlockSpec((tm, in_f), lambda i, j: (i, 0)),    # x batch tile
            pl.BlockSpec((in_f, tn), lambda i, j: (0, j)),    # W^T N-tile
            pl.BlockSpec((1, tn), lambda i, j: (0, j)),       # bias N-tile
            pl.BlockSpec((in_f, r_p), lambda i, j: (0, 0)),   # A^T (small, resident)
            pl.BlockSpec((r_p, tn), lambda i, j: (0, j)),     # B^T N-tile
        ],
        out_specs=pl.BlockSpec((tm, tn), lambda i, j: (i, j)),
        scratch_shapes=[pltpu.VMEM((tm, r_p), param_dtype)],  # cached z = x @ A^T
        compiler_params=pltpu.CompilerParams(
            # z scratch is carried across the N axis -> "arbitrary";
            # batch tiles are independent -> "parallel" (megacore on v7x).
            dimension_semantics=("parallel", "arbitrary"),
            vmem_limit_bytes=48 * 1024 * 1024,
        ),
    )(xp, Wt, bias, At, Bt)

    return out[:batch, :out_f]


if __name__ == "__main__":
    key = jax.random.PRNGKey(0)
    kx, kw, kb, ka, kB, kx2 = jax.random.split(key, 6)

    # Shapes consistent with the module: original_layer = nn.Linear(32, 32), r = 8.
    batch, in_f, out_f, r = 16, 32, 32, 8
    x = jax.random.normal(kx, (batch, in_f), dtype=jnp.float32)
    W = jax.random.normal(kw, (out_f, in_f), dtype=jnp.float32) * 0.1
    b = jax.random.normal(kb, (out_f,), dtype=jnp.float32) * 0.1
    A = jax.random.normal(ka, (r, in_f), dtype=jnp.float32) * 0.1
    B = jax.random.normal(kB, (out_f, r), dtype=jnp.float32) * 0.1

    y = jax.block_until_ready(lora_forward(x, W, b, A, B))
    y_ref = x @ W.T + b + (x @ A.T) @ B.T
    assert y.shape == (batch, out_f)
    assert jnp.allclose(y, y_ref, atol=1e-4, rtol=1e-4)

    # Second check: ragged batch / out_features and a multi-tile grid on both
    # axes (exercises padding, the N-tiled weights and the z scratch reuse).
    batch2, out_f2 = 20, 200
    x2 = jax.random.normal(kx2, (batch2, in_f), dtype=jnp.float32)
    W2 = jax.random.normal(kw, (out_f2, in_f), dtype=jnp.float32) * 0.1
    b2 = jax.random.normal(kb, (out_f2,), dtype=jnp.float32) * 0.1
    B2 = jax.random.normal(kB, (out_f2, r), dtype=jnp.float32) * 0.1
    y2 = jax.block_until_ready(
        lora_forward(x2, W2, b2, A, B2, tm_max=16, tn_max=128))
    y2_ref = x2 @ W2.T + b2 + (x2 @ A.T) @ B2.T
    assert y2.shape == (batch2, out_f2)
    assert jnp.allclose(y2, y2_ref, atol=1e-4, rtol=1e-4)

    print("KERNEL_OK")
</pallas_src>

<mosaic_0001>
module attributes {stable_mosaic.version = 11 : i64} {
  func.func @lora_kernel(%arg0: i32, %arg1: i32, %arg2: memref<16x32xf32, #tpu.memory_space<vmem>>, %arg3: memref<32x128xf32, #tpu.memory_space<vmem>>, %arg4: memref<1x128xf32, #tpu.memory_space<vmem>>, %arg5: memref<32x128xf32, #tpu.memory_space<vmem>>, %arg6: memref<128x128xf32, #tpu.memory_space<vmem>>, %arg7: memref<16x128xf32, #tpu.memory_space<vmem>>, %arg8: memref<16x128xf32, #tpu.memory_space<vmem>>) attributes {dimension_semantics = [#tpu.dimension_semantics<parallel>, #tpu.dimension_semantics<arbitrary>], iteration_bounds = array<i64: 1, 1>, scalar_prefetch = 0 : i64, scratch_operands = 1 : i64, tpu.core_type = #tpu.core_type<tc>, window_params = [{transform_indices = @transform_0, window_bounds = array<i64: 16, 32>}, {transform_indices = @transform_1, window_bounds = array<i64: 32, 128>}, {transform_indices = @transform_2, window_bounds = array<i64: 1, 128>}, {pipeline_mode = #tpu.pipeline_mode<synchronous>, transform_indices = @transform_3, window_bounds = array<i64: 32, 128>}, {transform_indices = @transform_4, window_bounds = array<i64: 128, 128>}, {transform_indices = @transform_5, window_bounds = array<i64: 16, 128>}]} {
    %c0 = arith.constant 0 : index
    %c0_0 = arith.constant 0 : index
    %0 = vector.load %arg2[%c0, %c0_0] : memref<16x32xf32, #tpu.memory_space<vmem>>, vector<16x32xf32>
    %c0_i32 = arith.constant 0 : i32
    %1 = arith.cmpi eq, %arg1, %c0_i32 : i32
    %2 = arith.extui %1 : i1 to i32
    %c0_i32_1 = arith.constant 0 : i32
    %3 = arith.cmpi ne, %2, %c0_i32_1 : i32
    scf.if %3 {
      %c0_13 = arith.constant 0 : index
      %c0_14 = arith.constant 0 : index
      %14 = vector.load %arg5[%c0_13, %c0_14] : memref<32x128xf32, #tpu.memory_space<vmem>>, vector<32x128xf32>
      %cst_15 = arith.constant dense<0.000000e+00> : vector<16x128xf32>
      %15 = tpu.matmul %0, %14, %cst_15 {dimension_numbers = #tpu.dot_dimension_numbers<[1], [0], [0], [1], [0, 0, 1, 1], [], []>} : vector<16x32xf32>, vector<32x128xf32>, vector<16x128xf32> -> vector<16x128xf32>
      %c0_16 = arith.constant 0 : index
      %c0_17 = arith.constant 0 : index
      %16 = vector.load %arg8[%c0_16, %c0_17] : memref<16x128xf32, #tpu.memory_space<vmem>>, vector<16x128xf32>
      tpu.vector_store %arg8[%c0_16, %c0_17], %15 {strides = array<i32>} : memref<16x128xf32, #tpu.memory_space<vmem>>, vector<16x128xf32>,
    } else {
    }
    %c0_2 = arith.constant 0 : index
    %c0_3 = arith.constant 0 : index
    %4 = vector.load %arg3[%c0_2, %c0_3] : memref<32x128xf32, #tpu.memory_space<vmem>>, vector<32x128xf32>
    %cst = arith.constant dense<0.000000e+00> : vector<16x128xf32>
    %5 = tpu.matmul %0, %4, %cst {dimension_numbers = #tpu.dot_dimension_numbers<[1], [0], [0], [1], [0, 0, 1, 1], [], []>} : vector<16x32xf32>, vector<32x128xf32>, vector<16x128xf32> -> vector<16x128xf32>
    %c0_4 = arith.constant 0 : index
    %c0_5 = arith.constant 0 : index
    %6 = vector.load %arg8[%c0_4, %c0_5] : memref<16x128xf32, #tpu.memory_space<vmem>>, vector<16x128xf32>
    %c0_6 = arith.constant 0 : index
    %c0_7 = arith.constant 0 : index
    %7 = vector.load %arg6[%c0_6, %c0_7] : memref<128x128xf32, #tpu.memory_space<vmem>>, vector<128x128xf32>
    %cst_8 = arith.constant dense<0.000000e+00> : vector<16x128xf32>
    %8 = tpu.matmul %6, %7, %cst_8 {dimension_numbers = #tpu.dot_dimension_numbers<[1], [0], [0], [1], [0, 0, 1, 1], [], []>} : vector<16x128xf32>, vector<128x128xf32>, vector<16x128xf32> -> vector<16x128xf32>
    %9 = arith.addf %5, %8 : vector<16x128xf32>
    %c0_9 = arith.constant 0 : index
    %c0_10 = arith.constant 0 : index
    %10 = vector.load %arg4[%c0_9, %c0_10] : memref<1x128xf32, #tpu.memory_space<vmem>>, vector<1x128xf32>
    %11 = vector.broadcast %10 : vector<1x128xf32> to vector<16x128xf32>
    %12 = arith.addf %9, %11 : vector<16x128xf32>
    %c0_11 = arith.constant 0 : index
    %c0_12 = arith.constant 0 : index
    %13 = vector.load %arg7[%c0_11, %c0_12] : memref<16x128xf32, #tpu.memory_space<vmem>>, vector<16x128xf32>
    tpu.vector_store %arg7[%c0_11, %c0_12], %12 {strides = array<i32>} : memref<16x128xf32, #tpu.memory_space<vmem>>, vector<16x128xf32>,
    return
  }
  func.func @transform_0(%arg0: i32, %arg1: i32) -> (i32, i32) {
    %c0_i32 = arith.constant 0 : i32
    %c0_i32_0 = arith.constant 0 : i32
    return %arg0, %c0_i32 : i32, i32
  }
  func.func @transform_1(%arg0: i32, %arg1: i32) -> (i32, i32) {
    %c0_i32 = arith.constant 0 : i32
    %c0_i32_0 = arith.constant 0 : i32
    return %c0_i32, %arg1 : i32, i32
  }
  func.func @transform_2(%arg0: i32, %arg1: i32) -> (i32, i32) {
    %c0_i32 = arith.constant 0 : i32
    %c0_i32_0 = arith.constant 0 : i32
    return %c0_i32, %arg1 : i32, i32
  }
  func.func @transform_3(%arg0: i32, %arg1: i32) -> (i32, i32) {
    %c0_i32 = arith.constant 0 : i32
    %c0_i32_0 = arith.constant 0 : i32
    %c0_i32_1 = arith.constant 0 : i32
    return %c0_i32, %c0_i32_0 : i32, i32
  }
  func.func @transform_4(%arg0: i32, %arg1: i32) -> (i32, i32) {
    %c0_i32 = arith.constant 0 : i32
    %c0_i32_0 = arith.constant 0 : i32
    return %c0_i32, %arg1 : i32, i32
  }
  func.func @transform_5(%arg0: i32, %arg1: i32) -> (i32, i32) {
    %c0_i32 = arith.constant 0 : i32
    return %arg0, %arg1 : i32, i32
  }
}

</mosaic_0001>

<llo_original>
// kernel: lora_forward.1
$region0: #{lora_forward.1}
  #allocation0 [shape = 'u32[]', space=smem, size = 0x4, offset = 0x4, fixed_abs, tag = 'smem constant byte address 0x4 - core index']
  #allocation1 [shape = 'u32[144,128]{1,0:T(1,128)}', space=vmem, size = 0x12000, scoped, tag = 'internal scratch']
  #allocation2 [shape = 'f32[16,128]{1,0:T(8,128)}', space=vmem, size = 0x2000, scoped, tag = 'scratch operand']
  %s0 = inlined_call_operand.vmem [shape: f32[16,32], index: 0, kind: input, shape index: {}]
  %s1 = inlined_call_operand.vmem [shape: f32[32,128], index: 1, kind: input, shape index: {}]
  %s2 = inlined_call_operand.vmem [shape: f32[1,128], index: 2, kind: input, shape index: {}]
  %s3 = inlined_call_operand.vmem [shape: f32[32,128], index: 3, kind: input, shape index: {}]
  %s4 = inlined_call_operand.vmem [shape: f32[128,128], index: 4, kind: input, shape index: {}]
  %s5 = inlined_call_operand.hbm [shape: f32[16,128], index: 5, kind: output, shape index: {}]
  %s6 = sld [smem:[#allocation0]]
  $region34: #{lora_forward.1} parent=0
    _
  %s8 = ssub.s32 1, %s6
  %s9 = scalar_select 0, %s8, %s6
  $region1: #{lora_forward.1} parent=0
    #allocation3 [shape = 'u8[8192]{0}', space=vmem, size = 0x2000, scoped, tag = 'output window, operand 0, single buffered']
    #allocation4 [shape = 's32[1]{0}', space=sflag, size = 0x4, scoped, tag = 'scoped memory for lora_forward.1']
    %10 = vsyncpa [#allocation4], 0
    // Predicated region
    $region2: #{lora_forward.1} parent=1 // pred_check
      _
    $region3: #{lora_forward.1} parent=1 // pred_check_branch
      %12 = sbr.rel (0) target = $region5
    $region4: #{lora_forward.1} parent=1 // pred_region
      _
    $region5: #{lora_forward.1} parent=1 // pred_fallthru
      _
    // Predicated region
    $region6: #{lora_forward.1} parent=1 // pred_check
      _
    $region7: #{lora_forward.1} parent=1 // pred_check_branch
      %14 = sbr.rel (0) target = $region9
    $region8: #{lora_forward.1} parent=1 // pred_region
      _
    $region9: #{lora_forward.1} parent=1 // pred_fallthru
      _
    // Predicated region
    $region10: #{lora_forward.1} parent=1 // pred_check
      _
    $region11: #{lora_forward.1} parent=1 // pred_check_branch
      %16 = sbr.rel (0) target = $region13
    $region12: #{lora_forward.1} parent=1 // pred_region
      _
    $region13: #{lora_forward.1} parent=1 // pred_fallthru
      _
    // Predicated region
    $region14: #{lora_forward.1} parent=1 // pred_check
      _
    $region15: #{lora_forward.1} parent=1 // pred_check_branch
      %18 = sbr.rel (0) target = $region17
    $region16: #{lora_forward.1} parent=1 // pred_region
      _
    $region17: #{lora_forward.1} parent=1 // pred_fallthru
      _
    // Predicated region
    $region18: #{lora_forward.1} parent=1 // pred_check
      _
    $region19: #{lora_forward.1} parent=1 // pred_check_branch
      %20 = sbr.rel (0) target = $region21
    $region20: #{lora_forward.1} parent=1 // pred_region
      _
    $region21: #{lora_forward.1} parent=1 // pred_fallthru
      _
    %v21 = vld [vmem:[%s0] sm:$0xff]
    %v22 = vld [vmem:[%s0 + $0x8] sm:$0xff]
    %p23 = scmp.eq.s32.totalorder 0, 0
    // Predicated region
    $region22: #{lora_forward.1} parent=1 // pred_check
      %p24 = pneg %p23
    $region23: #{lora_forward.1} parent=1 // pred_check_branch
      %26 = sbr.rel (%p24) target = $region25
    $region24: #{lora_forward.1} parent=1 // pred_region
      %v27 = vld [vmem:[%s3] sm:$0xff]
      %v28 = vld [vmem:[%s3 + $0x8] sm:$0xff]
      %v29 = vld [vmem:[%s3 + $0x10] sm:$0xff]
      %v30 = vld [vmem:[%s3 + $0x18] sm:$0xff]
      %vm31 = vcmask 261120
      %v33 = vsel %vm31, %v21, 0
      %v36 = vsel %vm31, %v22, 0
      %38 = vmatprep.subr.mxu0 0.0
      %39 = vmatpush1.msra.mxu0 0.0
      %40 = vmatprep.subr.mxu0 0.0
      %41 = vmatpush1.msra.mxu0 0.0
      %42 = vmatprep.subr.mxu0 0.0
      %43 = vmatpush1.msra.mxu0 0.0
      %44 = vmatprep.subr.mxu0 0.0
      %45 = vmatpush1.msra.mxu0 0.0
      %46 = vmatprep.subr.mxu0 0.0
      %47 = vmatpush1.msra.mxu0 0.0
      %48 = vmatprep.subr.mxu0 0.0
      %49 = vmatpush1.msra.mxu0 0.0
      %50 = vmatprep.subr.mxu0 0.0
      %51 = vmatpush1.msra.mxu0 0.0
      %52 = vmatprep.subr.mxu0 0.0
      %53 = vmatpush1.msra.mxu0 0.0
      %54 = vmatprep.subr.mxu0 0.0
      %55 = vmatpush1.msra.mxu0 0.0
      %56 = vmatprep.subr.mxu0 0.0
      %57 = vmatpush1.msra.mxu0 0.0
      %58 = vmatprep.subr.mxu0 0.0
      %59 = vmatpush1.msra.mxu0 0.0
      %60 = vmatprep.subr.mxu0 0.0
      %61 = vmatpush1.msra.mxu0 0.0
      %62 = vmatprep.subr.mxu0 0.0
      %63 = vmatpush1.msra.mxu0 %v30
      %64 = vmatprep.subr.mxu0 0.0
      %65 = vmatpush1.msra.mxu0 %v29
      %66 = vmatprep.subr.mxu0 0.0
      %67 = vmatpush1.msra.mxu0 %v28
      %68 = vmatprep.subr.mxu0 0.0
      %69 = vmatpush1.msra.mxu0 %v27
      %70 = vmatprep.subr.mxu0 0.0
      %71 = vmatpush2.msra.mxu0 0.0
      %72 = vmatprep.subr.mxu0 0.0
      %73 = vmatpush2.msra.mxu0 0.0
      %74 = vmatprep.subr.mxu0 0.0
      %75 = vmatpush2.msra.mxu0 0.0
      %76 = vmatprep.subr.mxu0 0.0
      %77 = vmatpush2.msra.mxu0 0.0
      %78 = vmatprep.subr.mxu0 0.0
      %79 = vmatpush2.msra.mxu0 0.0
      %80 = vmatprep.subr.mxu0 0.0
      %81 = vmatpush2.msra.mxu0 0.0
      %82 = vmatprep.subr.mxu0 0.0
      %83 = vmatpush2.msra.mxu0 0.0
      %84 = vmatprep.subr.mxu0 0.0
      %85 = vmatpush2.msra.mxu0 0.0
      %86 = vmatprep.subr.mxu0 0.0
      %87 = vmatpush2.msra.mxu0 0.0
      %88 = vmatprep.subr.mxu0 0.0
      %89 = vmatpush2.msra.mxu0 0.0
      %90 = vmatprep.subr.mxu0 0.0
      %91 = vmatpush2.msra.mxu0 0.0
      %92 = vmatprep.subr.mxu0 0.0
      %93 = vmatpush2.msra.mxu0 0.0
      %94 = vmatprep.subr.mxu0 0.0
      %95 = vmatpush2.msra.mxu0 0.0
      %96 = vmatprep.subr.mxu0 0.0
      %97 = vmatpush2.msra.mxu0 0.0
      %98 = vmatprep.subr.mxu0 0.0
      %99 = vmatpush2.msra.mxu0 0.0
      %100 = vmatprep.subr.mxu0 0.0
      %101 = vmatpush2.msra.mxu0 0.0
      %102 = vmatprep.mubr.f32.mxu0 0.0
      %103 = vmatmul.mubr.f32.gmra.mxu0 %v33
      %v104 = vpop.f32.mrf.mxu0
      %v105 = vadd.f32 0.0, %v104
      %v106 = vpop.f32.mrf.mxu0
      %107 = vmatprep.mubr.f32.mxu0 0.0
      %108 = vmatmul.mubr.f32.gmra.mxu0 %v36
      %v109 = vpop.f32.mrf.mxu0
      %v110 = vadd.f32 0.0, %v109
      %v111 = vpop.f32.mrf.mxu0
      %112 = vdwg.mxu0
      %113 = vst [vmem:[#allocation2] sm:$0xff] %v105
      %114 = vst [vmem:[#allocation2 + $0x8] sm:$0xff] %v110
    $region25: #{lora_forward.1} parent=1 // pred_fallthru
      _
    %v115 = vld [vmem:[%s1] sm:$0xff]
    %v116 = vld [vmem:[%s1 + $0x8] sm:$0xff]
    %v117 = vld [vmem:[%s1 + $0x10] sm:$0xff]
    %v118 = vld [vmem:[%s1 + $0x18] sm:$0xff]
    %v119 = vld [vmem:[#allocation2] sm:$0xff]
    %v120 = vld [vmem:[#allocation2 + $0x8] sm:$0xff]
    %v121 = vld [vmem:[%s4] sm:$0xff]
    %v122 = vld [vmem:[%s4 + $0x8] sm:$0xff]
    %v123 = vld [vmem:[%s4 + $0x10] sm:$0xff]
    %v124 = vld [vmem:[%s4 + $0x18] sm:$0xff]
    %v125 = vld [vmem:[%s4 + $0x20] sm:$0xff]
    %v126 = vld [vmem:[%s4 + $0x28] sm:$0xff]
    %v127 = vld [vmem:[%s4 + $0x30] sm:$0xff]
    %v128 = vld [vmem:[%s4 + $0x38] sm:$0xff]
    %v129 = vld [vmem:[%s4 + $0x40] sm:$0xff]
    %v130 = vld [vmem:[%s4 + $0x48] sm:$0xff]
    %v131 = vld [vmem:[%s4 + $0x50] sm:$0xff]
    %v132 = vld [vmem:[%s4 + $0x58] sm:$0xff]
    %v133 = vld [vmem:[%s4 + $0x60] sm:$0xff]
    %v134 = vld [vmem:[%s4 + $0x68] sm:$0xff]
    %v135 = vld [vmem:[%s4 + $0x70] sm:$0xff]
    %v136 = vld [vmem:[%s4 + $0x78] sm:$0xff]
    %137 = vmatprep.subr.mxu0 0.0
    %138 = vmatpush1.msra.mxu0 %v136
    %139 = vmatprep.subr.mxu0 0.0
    %140 = vmatpush1.msra.mxu0 %v135
    %141 = vmatprep.subr.mxu0 0.0
    %142 = vmatpush1.msra.mxu0 %v134
    %143 = vmatprep.subr.mxu0 0.0
    %144 = vmatpush1.msra.mxu0 %v133
    %145 = vmatprep.subr.mxu0 0.0
    %146 = vmatpush1.msra.mxu0 %v132
    %147 = vmatprep.subr.mxu0 0.0
    %148 = vmatpush1.msra.mxu0 %v131
    %149 = vmatprep.subr.mxu0 0.0
    %150 = vmatpush1.msra.mxu0 %v130
    %151 = vmatprep.subr.mxu0 0.0
    %152 = vmatpush1.msra.mxu0 %v129
    %153 = vmatprep.subr.mxu0 0.0
    %154 = vmatpush1.msra.mxu0 %v128
    %155 = vmatprep.subr.mxu0 0.0
    %156 = vmatpush1.msra.mxu0 %v127
    %157 = vmatprep.subr.mxu0 0.0
    %158 = vmatpush1.msra.mxu0 %v126
    %159 = vmatprep.subr.mxu0 0.0
    %160 = vmatpush1.msra.mxu0 %v125
    %161 = vmatprep.subr.mxu0 0.0
    %162 = vmatpush1.msra.mxu0 %v124
    %163 = vmatprep.subr.mxu0 0.0
    %164 = vmatpush1.msra.mxu0 %v123
    %165 = vmatprep.subr.mxu0 0.0
    %166 = vmatpush1.msra.mxu0 %v122
    %167 = vmatprep.subr.mxu0 0.0
    %168 = vmatpush1.msra.mxu0 %v121
    %169 = vmatprep.subr.mxu0 0.0
    %170 = vmatpush2.msra.mxu0 0.0
    %171 = vmatprep.subr.mxu0 0.0
    %172 = vmatpush2.msra.mxu0 0.0
    %173 = vmatprep.subr.mxu0 0.0
    %174 = vmatpush2.msra.mxu0 0.0
    %175 = vmatprep.subr.mxu0 0.0
    %176 = vmatpush2.msra.mxu0 0.0
    %177 = vmatprep.subr.mxu0 0.0
    %178 = vmatpush2.msra.mxu0 0.0
    %179 = vmatprep.subr.mxu0 0.0
    %180 = vmatpush2.msra.mxu0 0.0
    %181 = vmatprep.subr.mxu0 0.0
    %182 = vmatpush2.msra.mxu0 0.0
    %183 = vmatprep.subr.mxu0 0.0
    %184 = vmatpush2.msra.mxu0 0.0
    %185 = vmatprep.subr.mxu0 0.0
    %186 = vmatpush2.msra.mxu0 0.0
    %187 = vmatprep.subr.mxu0 0.0
    %188 = vmatpush2.msra.mxu0 0.0
    %189 = vmatprep.subr.mxu0 0.0
    %190 = vmatpush2.msra.mxu0 0.0
    %191 = vmatprep.subr.mxu0 0.0
    %192 = vmatpush2.msra.mxu0 0.0
    %193 = vmatprep.subr.mxu0 0.0
    %194 = vmatpush2.msra.mxu0 0.0
    %195 = vmatprep.subr.mxu0 0.0
    %196 = vmatpush2.msra.mxu0 0.0
    %197 = vmatprep.subr.mxu0 0.0
    %198 = vmatpush2.msra.mxu0 0.0
    %199 = vmatprep.subr.mxu0 0.0
    %200 = vmatpush2.msra.mxu0 0.0
    %201 = vmatprep.mubr.f32.mxu0 0.0
    %202 = vmatmul.mubr.f32.gmra.mxu0 %v119
    %v203 = vpop.f32.mrf.mxu0
    %v204 = vadd.f32 0.0, %v203
    %v205 = vpop.f32.mrf.mxu0
    %206 = vmatprep.mubr.f32.mxu0 0.0
    %207 = vmatmul.mubr.f32.gmra.mxu0 %v120
    %v208 = vpop.f32.mrf.mxu0
    %v209 = vadd.f32 0.0, %v208
    %v210 = vpop.f32.mrf.mxu0
    %211 = vdwg.mxu0
    %vm212 = vcmask 261120
    %v214 = vsel %vm212, %v21, 0
    %v217 = vsel %vm212, %v22, 0
    %219 = vmatprep.subr.mxu0 0.0
    %220 = vmatpush1.msra.mxu0 0.0
    %221 = vmatprep.subr.mxu0 0.0
    %222 = vmatpush1.msra.mxu0 0.0
    %223 = vmatprep.subr.mxu0 0.0
    %224 = vmatpush1.msra.mxu0 0.0
    %225 = vmatprep.subr.mxu0 0.0
    %226 = vmatpush1.msra.mxu0 0.0
    %227 = vmatprep.subr.mxu0 0.0
    %228 = vmatpush1.msra.mxu0 0.0
    %229 = vmatprep.subr.mxu0 0.0
    %230 = vmatpush1.msra.mxu0 0.0
    %231 = vmatprep.subr.mxu0 0.0
    %232 = vmatpush1.msra.mxu0 0.0
    %233 = vmatprep.subr.mxu0 0.0
    %234 = vmatpush1.msra.mxu0 0.0
    %235 = vmatprep.subr.mxu0 0.0
    %236 = vmatpush1.msra.mxu0 0.0
    %237 = vmatprep.subr.mxu0 0.0
    %238 = vmatpush1.msra.mxu0 0.0
    %239 = vmatprep.subr.mxu0 0.0
    %240 = vmatpush1.msra.mxu0 0.0
    %241 = vmatprep.subr.mxu0 0.0
    %242 = vmatpush1.msra.mxu0 0.0
    %243 = vmatprep.subr.mxu0 0.0
    %244 = vmatpush1.msra.mxu0 %v118
    %245 = vmatprep.subr.mxu0 0.0
    %246 = vmatpush1.msra.mxu0 %v117
    %247 = vmatprep.subr.mxu0 0.0
    %248 = vmatpush1.msra.mxu0 %v116
    %249 = vmatprep.subr.mxu0 0.0
    %250 = vmatpush1.msra.mxu0 %v115
    %251 = vmatprep.subr.mxu0 0.0
    %252 = vmatpush2.msra.mxu0 0.0
    %253 = vmatprep.subr.mxu0 0.0
    %254 = vmatpush2.msra.mxu0 0.0
    %255 = vmatprep.subr.mxu0 0.0
    %256 = vmatpush2.msra.mxu0 0.0
    %257 = vmatprep.subr.mxu0 0.0
    %258 = vmatpush2.msra.mxu0 0.0
    %259 = vmatprep.subr.mxu0 0.0
    %260 = vmatpush2.msra.mxu0 0.0
    %261 = vmatprep.subr.mxu0 0.0
    %262 = vmatpush2.msra.mxu0 0.0
    %263 = vmatprep.subr.mxu0 0.0
    %264 = vmatpush2.msra.mxu0 0.0
    %265 = vmatprep.subr.mxu0 0.0
    %266 = vmatpush2.msra.mxu0 0.0
    %267 = vmatprep.subr.mxu0 0.0
    %268 = vmatpush2.msra.mxu0 0.0
    %269 = vmatprep.subr.mxu0 0.0
    %270 = vmatpush2.msra.mxu0 0.0
    %271 = vmatprep.subr.mxu0 0.0
    %272 = vmatpush2.msra.mxu0 0.0
    %273 = vmatprep.subr.mxu0 0.0
    %274 = vmatpush2.msra.mxu0 0.0
    %275 = vmatprep.subr.mxu0 0.0
    %276 = vmatpush2.msra.mxu0 0.0
    %277 = vmatprep.subr.mxu0 0.0
    %278 = vmatpush2.msra.mxu0 0.0
    %279 = vmatprep.subr.mxu0 0.0
    %280 = vmatpush2.msra.mxu0 0.0
    %281 = vmatprep.subr.mxu0 0.0
    %282 = vmatpush2.msra.mxu0 0.0
    %283 = vmatprep.mubr.f32.mxu0 0.0
    %284 = vmatmul.mubr.f32.gmra.mxu0 %v214
    %v285 = vpop.f32.mrf.mxu0
    %v286 = vadd.f32 %v204, %v285
    %v287 = vpop.f32.mrf.mxu0
    %288 = vmatprep.mubr.f32.mxu0 0.0
    %289 = vmatmul.mubr.f32.gmra.mxu0 %v217
    %v290 = vpop.f32.mrf.mxu0
    %v291 = vadd.f32 %v209, %v290
    %v292 = vpop.f32.mrf.mxu0
    %293 = vdwg.mxu0
    %v294 = vld [vmem:[%s2] sm:$0x1]
    %v296 = vlaneseq
    %v297 = vshrl.u32 %v296, 7
    %v298 = vsub.s32 0, %v297
    %v299 = vrot.slane %v294, %v298
    %v301 = vadd.f32 %v286, %v299
    %v302 = vadd.f32 %v291, %v299
    %303 = vst [vmem:[#allocation3] sm:$0xff] %v301
    %304 = vst [vmem:[#allocation3 + $0x8] sm:$0xff] %v302
    // Predicated region
    $region26: #{lora_forward.1} parent=1 // pred_check
      _
    $region27: #{lora_forward.1} parent=1 // pred_check_branch
      %306 = sbr.rel (0) target = $region29
    $region28: #{lora_forward.1} parent=1 // pred_region
      %s308 = ssub.s32 256, 256
      %309 = vsyncadd [#allocation4], %s308
      %s310 = sshll.u32 [#allocation3], 4
      %s311 = int_to_ptr.vmem [resolvable:$true] %s310
      %316 = dma.vmem_to_hbm [thread:$0]  %s311, 256, %s5, [#allocation4], 128, 128, 8
    $region29: #{lora_forward.1} parent=1 // pred_fallthru
      _
    // Predicated region
    $region30: #{lora_forward.1} parent=1 // pred_check
      _
    $region31: #{lora_forward.1} parent=1 // pred_check_branch
      %318 = sbr.rel (0) target = $region33
    $region32: #{lora_forward.1} parent=1 // pred_region
      %319 = dma.done [#allocation4], 256
    $region33: #{lora_forward.1} parent=1 // pred_fallthru
      _
    %320 = vsyncpa [#allocation4], 1

</llo_original>
